<compile_context>
chip_gen: v6e
topology: v6e:2x2x1
jax: 0.10.0
libtpu: 0.0.40
codegen_flags: <defaults>
</compile_context>

<pallas_src>
import jax
import jax.numpy as jnp
from jax.experimental import pallas as pl
from jax.experimental.pallas import tpu as pltpu


def _round_up(n, m):
    return ((n + m - 1) // m) * m


def _fcnet2_kernel(t_ref, x_ref, w1x_ref, c_ref, head_ref, o_ref):
    """All operands in batch-on-lanes layout.

    t_ref    : (1,    TB)       time column
    x_ref    : (xdim, TB)       state columns
    w1x_ref  : (H,    xdim)     state part of W1
    c_ref    : (H,    2)        [:,0:1] = b1 + w1_t, [:,1:2] = w1_t
    head_ref : (wdim, H+1)      [:, :H] = Whead, [:, H:] = bhead
    o_ref    : (wdim, TB)
    """
    H = c_ref.shape[0]
    b1p = c_ref[:, 0:1]                       # (H, 1)  = b1 + 1*w1_t
    w1t = c_ref[:, 1:2]                       # (H, 1)

    # First layer with the concat folded away:
    #   concat([1-t, x]) @ W1.T + b1  ==  W1_x @ x + (b1 + w1_t) - w1_t * t
    pre = (jnp.dot(w1x_ref[...], x_ref[...], preferred_element_type=jnp.float32)
           + b1p
           - w1t * t_ref[...])                # (H,1)*(1,TB) VPU broadcast
    h = jnp.maximum(pre, 0.0)                 # ReLU, (H, TB)

    # Head: (wdim, H) @ (H, TB) + (wdim, 1)   -> lane-dense (wdim, TB) store.
    o_ref[...] = (jnp.dot(head_ref[:, :H], h, preferred_element_type=jnp.float32)
                  + head_ref[:, H:])


def model2_forward(t, x, params, *, block_cols=8192):
    """t: (B, 1), x: (B, xdim) -> (B, wdim)   (float32)."""
    w1, b1, wh, bh = params["w1"], params["b1"], params["wh"], params["bh"]
    B = t.shape[0]
    xdim = x.shape[1]
    H = w1.shape[0]
    wdim = wh.shape[0]

    # --- wrapper-side weight prep (runs once in XLA, outside the kernel) ---
    w1_t = w1[:, :1]                              # (H, 1)   time column of W1
    w1_x = w1[:, 1:]                              # (H, xdim) state columns of W1
    b1p = b1.reshape(H, 1) + w1_t                 # (H, 1)   b1 + 1*w1_t folded
    consts = jnp.concatenate([b1p, w1_t], axis=1)             # (H, 2)
    head_c = jnp.concatenate([wh, bh.reshape(wdim, 1)], axis=1)  # (wdim, H+1)

    # --- batch tiling over the lane axis ---
    b_128 = _round_up(max(B, 1), 128)
    tb = max(128, min(_round_up(block_cols, 128), b_128))
    if b_128 >= 2 * 128 and b_128 <= tb:
        # Whole batch would be a single tile: split in two so both TensorCores
        # on v7x get work via the "parallel" grid axis.
        tb = _round_up((b_128 + 1) // 2, 128)
    b_pad = _round_up(b_128, tb)
    n_tiles = b_pad // tb
    pad = b_pad - B

    # Batch-on-lanes inputs.  t: (B,1)->(1,B) is a free reshape; x needs one
    # transpose copy (4 B-rows wide), fused with the small tail pad by XLA.
    t_l = jnp.pad(t.reshape(1, B), ((0, 0), (0, pad)))
    x_l = jnp.pad(x.T, ((0, 0), (0, pad)))

    tiled = lambda rows: pl.BlockSpec((rows, tb), lambda i: (0, i))   # per-tile lanes
    whole = lambda shape: pl.BlockSpec(shape, lambda i: (0, 0))       # resident weights

    out = pl.pallas_call(
        _fcnet2_kernel,
        out_shape=jax.ShapeDtypeStruct((wdim, b_pad), jnp.float32),
        grid=(n_tiles,),
        in_specs=[
            tiled(1),              # t        (1, TB)
            tiled(xdim),           # x        (xdim, TB)
            whole((H, xdim)),      # W1_x
            whole((H, 2)),         # [b1 + w1_t | w1_t]
            whole((wdim, H + 1)),  # [Whead | bhead]
        ],
        out_specs=tiled(wdim),     # (wdim, TB) lane-dense output
        compiler_params=pltpu.CompilerParams(
            dimension_semantics=("parallel",)),   # shard batch tiles across TCs
    )(t_l, x_l, w1_x, consts, head_c)

    # (wdim, B) -> (B, wdim); for wdim == 1 this is a free reshape.
    return out[:, :B].T


def init_params(key, xdim, wdim, hidden):
    """Xavier-uniform weights / normal biases (matches init_parameters_)."""
    k1, k2, k3, k4 = jax.random.split(key, 4)

    def xavier(k, fan_out, fan_in):
        limit = jnp.sqrt(6.0 / (fan_in + fan_out))
        return jax.random.uniform(k, (fan_out, fan_in), jnp.float32, -limit, limit)

    return {
        "w1": xavier(k1, hidden, 1 + xdim),                    # (H, 1+xdim)
        "b1": jax.random.normal(k2, (hidden,), jnp.float32),   # (H,)
        "wh": xavier(k3, wdim, hidden),                        # (wdim, H)
        "bh": jax.random.normal(k4, (wdim,), jnp.float32),     # (wdim,)
    }


def model2_reference(t, x, params):
    z = jnp.concatenate([1.0 - t, x], axis=-1)
    h = jnp.maximum(z @ params["w1"].T + params["b1"], 0.0)
    return h @ params["wh"].T + params["bh"]


if __name__ == "__main__":
    # CartPole-like sizes: xdim=4 (state), Model2 forces wdim=1, hidden=32.
    xdim, wdim, hidden = 4, 1, 32
    key = jax.random.PRNGKey(0)
    kp, kt, kx = jax.random.split(key, 3)
    params = init_params(kp, xdim, wdim, hidden)

    # Small check (single 128-lane tile, padded batch).
    B = 8
    t = jax.random.uniform(kt, (B, 1), jnp.float32)
    x = jax.random.normal(kx, (B, xdim), jnp.float32)
    out = jax.block_until_ready(model2_forward(t, x, params))
    ref = model2_reference(t, x, params)
    assert out.shape == (B, wdim)
    assert jnp.allclose(out, ref, atol=1e-5, rtol=1e-5)

    # Ragged batch: default tiling -> 2 tiles (one per TensorCore on v7x).
    B2 = 300
    kt2, kx2 = jax.random.split(jax.random.PRNGKey(1))
    t2 = jax.random.uniform(kt2, (B2, 1), jnp.float32)
    x2 = jax.random.normal(kx2, (B2, xdim), jnp.float32)
    out2 = jax.block_until_ready(model2_forward(t2, x2, params))
    ref2 = model2_reference(t2, x2, params)
    assert out2.shape == (B2, wdim)
    assert jnp.allclose(out2, ref2, atol=1e-5, rtol=1e-5)

    # Force a small tile to exercise the multi-tile (3-step) grid + padding path.
    out3 = jax.block_until_ready(model2_forward(t2, x2, params, block_cols=128))
    assert jnp.allclose(out3, ref2, atol=1e-5, rtol=1e-5)

    print("KERNEL_OK")
</pallas_src>

<mosaic_0001>
module attributes {stable_mosaic.version = 11 : i64} {
  func.func @_fcnet2_kernel(%arg0: i32, %arg1: memref<1x128xf32, #tpu.memory_space<vmem>>, %arg2: memref<4x128xf32, #tpu.memory_space<vmem>>, %arg3: memref<32x4xf32, #tpu.memory_space<vmem>>, %arg4: memref<32x2xf32, #tpu.memory_space<vmem>>, %arg5: memref<1x33xf32, #tpu.memory_space<vmem>>, %arg6: memref<1x128xf32, #tpu.memory_space<vmem>>) attributes {dimension_semantics = [#tpu.dimension_semantics<parallel>], iteration_bounds = array<i64: 1>, scalar_prefetch = 0 : i64, scratch_operands = 0 : i64, tpu.core_type = #tpu.core_type<tc>, window_params = [{transform_indices = @transform_0, window_bounds = array<i64: 1, 128>}, {transform_indices = @transform_1, window_bounds = array<i64: 4, 128>}, {pipeline_mode = #tpu.pipeline_mode<synchronous>, transform_indices = @transform_2, window_bounds = array<i64: 32, 4>}, {pipeline_mode = #tpu.pipeline_mode<synchronous>, transform_indices = @transform_3, window_bounds = array<i64: 32, 2>}, {pipeline_mode = #tpu.pipeline_mode<synchronous>, transform_indices = @transform_4, window_bounds = array<i64: 1, 33>}, {transform_indices = @transform_5, window_bounds = array<i64: 1, 128>}]} {
    %c0 = arith.constant 0 : index
    %c0_0 = arith.constant 0 : index
    %0 = vector.load %arg4[%c0, %c0_0] : memref<32x2xf32, #tpu.memory_space<vmem>>, vector<32x1xf32>
    %c0_1 = arith.constant 0 : index
    %c1 = arith.constant 1 : index
    %1 = vector.load %arg4[%c0_1, %c1] : memref<32x2xf32, #tpu.memory_space<vmem>>, vector<32x1xf32>
    %c0_2 = arith.constant 0 : index
    %c0_3 = arith.constant 0 : index
    %2 = vector.load %arg3[%c0_2, %c0_3] : memref<32x4xf32, #tpu.memory_space<vmem>>, vector<32x4xf32>
    %c0_4 = arith.constant 0 : index
    %c0_5 = arith.constant 0 : index
    %3 = vector.load %arg2[%c0_4, %c0_5] : memref<4x128xf32, #tpu.memory_space<vmem>>, vector<4x128xf32>
    %cst = arith.constant dense<0.000000e+00> : vector<32x128xf32>
    %4 = tpu.matmul %2, %3, %cst {dimension_numbers = #tpu.dot_dimension_numbers<[1], [0], [0], [1], [0, 0, 1, 1], [], []>} : vector<32x4xf32>, vector<4x128xf32>, vector<32x128xf32> -> vector<32x128xf32>
    %5 = vector.broadcast %0 : vector<32x1xf32> to vector<32x128xf32>
    %6 = arith.addf %4, %5 : vector<32x128xf32>
    %c0_6 = arith.constant 0 : index
    %c0_7 = arith.constant 0 : index
    %7 = vector.load %arg1[%c0_6, %c0_7] : memref<1x128xf32, #tpu.memory_space<vmem>>, vector<1x128xf32>
    %8 = vector.broadcast %1 : vector<32x1xf32> to vector<32x128xf32>
    %9 = vector.broadcast %7 : vector<1x128xf32> to vector<32x128xf32>
    %10 = arith.mulf %8, %9 : vector<32x128xf32>
    %11 = arith.subf %6, %10 : vector<32x128xf32>
    %cst_8 = arith.constant 0.000000e+00 : f32
    %12 = vector.broadcast %cst_8 : f32 to vector<32x128xf32>
    %13 = arith.maximumf %11, %12 : vector<32x128xf32>
    %c0_9 = arith.constant 0 : index
    %c0_10 = arith.constant 0 : index
    %14 = vector.load %arg5[%c0_9, %c0_10] : memref<1x33xf32, #tpu.memory_space<vmem>>, vector<1x32xf32>
    %cst_11 = arith.constant dense<0.000000e+00> : vector<1x128xf32>
    %15 = tpu.matmul %14, %13, %cst_11 {dimension_numbers = #tpu.dot_dimension_numbers<[1], [0], [0], [1], [0, 0, 1, 1], [], []>} : vector<1x32xf32>, vector<32x128xf32>, vector<1x128xf32> -> vector<1x128xf32>
    %c0_12 = arith.constant 0 : index
    %c32 = arith.constant 32 : index
    %16 = vector.load %arg5[%c0_12, %c32] : memref<1x33xf32, #tpu.memory_space<vmem>>, vector<1x1xf32>
    %17 = vector.broadcast %16 : vector<1x1xf32> to vector<1x128xf32>
    %18 = arith.addf %15, %17 : vector<1x128xf32>
    %c0_13 = arith.constant 0 : index
    %c0_14 = arith.constant 0 : index
    %19 = vector.load %arg6[%c0_13, %c0_14] : memref<1x128xf32, #tpu.memory_space<vmem>>, vector<1x128xf32>
    tpu.vector_store %arg6[%c0_13, %c0_14], %18 {strides = array<i32>} : memref<1x128xf32, #tpu.memory_space<vmem>>, vector<1x128xf32>,
    return
  }
  func.func @transform_0(%arg0: i32) -> (i32, i32) {
    %c0_i32 = arith.constant 0 : i32
    %c0_i32_0 = arith.constant 0 : i32
    return %c0_i32, %arg0 : i32, i32
  }
  func.func @transform_1(%arg0: i32) -> (i32, i32) {
    %c0_i32 = arith.constant 0 : i32
    %c0_i32_0 = arith.constant 0 : i32
    return %c0_i32, %arg0 : i32, i32
  }
  func.func @transform_2(%arg0: i32) -> (i32, i32) {
    %c0_i32 = arith.constant 0 : i32
    %c0_i32_0 = arith.constant 0 : i32
    %c0_i32_1 = arith.constant 0 : i32
    return %c0_i32, %c0_i32_0 : i32, i32
  }
  func.func @transform_3(%arg0: i32) -> (i32, i32) {
    %c0_i32 = arith.constant 0 : i32
    %c0_i32_0 = arith.constant 0 : i32
    %c0_i32_1 = arith.constant 0 : i32
    return %c0_i32, %c0_i32_0 : i32, i32
  }
  func.func @transform_4(%arg0: i32) -> (i32, i32) {
    %c0_i32 = arith.constant 0 : i32
    %c0_i32_0 = arith.constant 0 : i32
    %c0_i32_1 = arith.constant 0 : i32
    return %c0_i32, %c0_i32_0 : i32, i32
  }
  func.func @transform_5(%arg0: i32) -> (i32, i32) {
    %c0_i32 = arith.constant 0 : i32
    %c0_i32_0 = arith.constant 0 : i32
    return %c0_i32, %arg0 : i32, i32
  }
}

</mosaic_0001>

<llo_original>
// kernel: tpu_custom_call.1
$region0: #{tpu_custom_call.1}
  #allocation0 [shape = 'u32[]', space=smem, size = 0x4, offset = 0x4, fixed_abs, tag = 'smem constant byte address 0x4 - core index']
  #allocation1 [shape = 'u32[144,128]{1,0:T(1,128)}', space=vmem, size = 0x12000, scoped, tag = 'internal scratch']
  %s0 = inlined_call_operand.vmem [shape: f32[1,128], index: 0, kind: input, shape index: {}]
  %s1 = inlined_call_operand.vmem [shape: f32[4,128], index: 1, kind: input, shape index: {}]
  %s2 = inlined_call_operand.vmem [shape: f32[32,4], index: 2, kind: input, shape index: {}]
  %s3 = inlined_call_operand.vmem [shape: f32[32,2], index: 3, kind: input, shape index: {}]
  %s4 = inlined_call_operand.vmem [shape: f32[1,33], index: 4, kind: input, shape index: {}]
  %s5 = inlined_call_operand.hbm [shape: f32[1,128], index: 5, kind: output, shape index: {}]
  %s6 = sld [smem:[#allocation0]]
  $region30: #{tpu_custom_call.1} parent=0
    _
  %s8 = ssub.s32 1, %s6
  %s9 = scalar_select 0, %s8, %s6
  $region1: #{tpu_custom_call.1} parent=0
    #allocation2 [shape = 'u8[512]{0}', space=vmem, size = 0x400, scoped, tag = 'output window, operand 0, single buffered']
    #allocation3 [shape = 's32[1]{0}', space=sflag, size = 0x4, scoped, tag = 'scoped memory for tpu_custom_call.1']
    %10 = vsyncpa [#allocation3], 0
    // Predicated region
    $region2: #{tpu_custom_call.1} parent=1 // pred_check
      _
    $region3: #{tpu_custom_call.1} parent=1 // pred_check_branch
      %12 = sbr.rel (0) target = $region5
    $region4: #{tpu_custom_call.1} parent=1 // pred_region
      _
    $region5: #{tpu_custom_call.1} parent=1 // pred_fallthru
      _
    // Predicated region
    $region6: #{tpu_custom_call.1} parent=1 // pred_check
      _
    $region7: #{tpu_custom_call.1} parent=1 // pred_check_branch
      %14 = sbr.rel (0) target = $region9
    $region8: #{tpu_custom_call.1} parent=1 // pred_region
      _
    $region9: #{tpu_custom_call.1} parent=1 // pred_fallthru
      _
    // Predicated region
    $region10: #{tpu_custom_call.1} parent=1 // pred_check
      _
    $region11: #{tpu_custom_call.1} parent=1 // pred_check_branch
      %16 = sbr.rel (0) target = $region13
    $region12: #{tpu_custom_call.1} parent=1 // pred_region
      _
    $region13: #{tpu_custom_call.1} parent=1 // pred_fallthru
      _
    // Predicated region
    $region14: #{tpu_custom_call.1} parent=1 // pred_check
      _
    $region15: #{tpu_custom_call.1} parent=1 // pred_check_branch
      %18 = sbr.rel (0) target = $region17
    $region16: #{tpu_custom_call.1} parent=1 // pred_region
      _
    $region17: #{tpu_custom_call.1} parent=1 // pred_fallthru
      _
    // Predicated region
    $region18: #{tpu_custom_call.1} parent=1 // pred_check
      _
    $region19: #{tpu_custom_call.1} parent=1 // pred_check_branch
      %20 = sbr.rel (0) target = $region21
    $region20: #{tpu_custom_call.1} parent=1 // pred_region
      _
    $region21: #{tpu_custom_call.1} parent=1 // pred_fallthru
      _
    %v21 = vld [vmem:[%s3] sm:$0xff]
    %v22 = vld [vmem:[%s3 + $0x8] sm:$0xff]
    %v23 = vld [vmem:[%s3 + $0x10] sm:$0xff]
    %v24 = vld [vmem:[%s3 + $0x18] sm:$0xff]
    %v25 = vld [vmem:[%s2] sm:$0xff]
    %v26 = vld [vmem:[%s2 + $0x8] sm:$0xff]
    %v27 = vld [vmem:[%s2 + $0x10] sm:$0xff]
    %v28 = vld [vmem:[%s2 + $0x18] sm:$0xff]
    %v29 = vld [vmem:[%s1] sm:$0xf]
    %31 = vset.pattern.permute.xlu0 0
    %32 = vperm.xlu0 %31, %v21
    %v33 = vpop.permute.xlu0 %32
    %36 = vset.pattern.permute.xlu0 0
    %37 = vperm.xlu0 %36, %v22
    %v38 = vpop.permute.xlu0 %37
    %41 = vset.pattern.permute.xlu0 0
    %42 = vperm.xlu0 %41, %v23
    %v43 = vpop.permute.xlu0 %42
    %46 = vset.pattern.permute.xlu0 0
    %47 = vperm.xlu0 %46, %v24
    %v48 = vpop.permute.xlu0 %47
    %vm50 = vcmask 31744
    %v52 = vsel %vm50, %v25, 0
    %v55 = vsel %vm50, %v26, 0
    %v58 = vsel %vm50, %v27, 0
    %v61 = vsel %vm50, %v28, 0
    %vm63 = vcmask 1043456
    %v65 = vsel %vm63, %v29, 0
    %67 = vmatprep.subr.mxu0 0.0
    %68 = vmatpush1.msra.mxu0 0.0
    %69 = vmatprep.subr.mxu0 0.0
    %70 = vmatpush1.msra.mxu0 0.0
    %71 = vmatprep.subr.mxu0 0.0
    %72 = vmatpush1.msra.mxu0 0.0
    %73 = vmatprep.subr.mxu0 0.0
    %74 = vmatpush1.msra.mxu0 0.0
    %75 = vmatprep.subr.mxu0 0.0
    %76 = vmatpush1.msra.mxu0 0.0
    %77 = vmatprep.subr.mxu0 0.0
    %78 = vmatpush1.msra.mxu0 0.0
    %79 = vmatprep.subr.mxu0 0.0
    %80 = vmatpush1.msra.mxu0 0.0
    %81 = vmatprep.subr.mxu0 0.0
    %82 = vmatpush1.msra.mxu0 0.0
    %83 = vmatprep.subr.mxu0 0.0
    %84 = vmatpush1.msra.mxu0 0.0
    %85 = vmatprep.subr.mxu0 0.0
    %86 = vmatpush1.msra.mxu0 0.0
    %87 = vmatprep.subr.mxu0 0.0
    %88 = vmatpush1.msra.mxu0 0.0
    %89 = vmatprep.subr.mxu0 0.0
    %90 = vmatpush1.msra.mxu0 0.0
    %91 = vmatprep.subr.mxu0 0.0
    %92 = vmatpush1.msra.mxu0 0.0
    %93 = vmatprep.subr.mxu0 0.0
    %94 = vmatpush1.msra.mxu0 0.0
    %95 = vmatprep.subr.mxu0 0.0
    %96 = vmatpush1.msra.mxu0 0.0
    %97 = vmatprep.subr.mxu0 0.0
    %98 = vmatpush1.msra.mxu0 %v65
    %99 = vmatprep.subr.mxu0 0.0
    %100 = vmatpush2.msra.mxu0 0.0
    %101 = vmatprep.subr.mxu0 0.0
    %102 = vmatpush2.msra.mxu0 0.0
    %103 = vmatprep.subr.mxu0 0.0
    %104 = vmatpush2.msra.mxu0 0.0
    %105 = vmatprep.subr.mxu0 0.0
    %106 = vmatpush2.msra.mxu0 0.0
    %107 = vmatprep.subr.mxu0 0.0
    %108 = vmatpush2.msra.mxu0 0.0
    %109 = vmatprep.subr.mxu0 0.0
    %110 = vmatpush2.msra.mxu0 0.0
    %111 = vmatprep.subr.mxu0 0.0
    %112 = vmatpush2.msra.mxu0 0.0
    %113 = vmatprep.subr.mxu0 0.0
    %114 = vmatpush2.msra.mxu0 0.0
    %115 = vmatprep.subr.mxu0 0.0
    %116 = vmatpush2.msra.mxu0 0.0
    %117 = vmatprep.subr.mxu0 0.0
    %118 = vmatpush2.msra.mxu0 0.0
    %119 = vmatprep.subr.mxu0 0.0
    %120 = vmatpush2.msra.mxu0 0.0
    %121 = vmatprep.subr.mxu0 0.0
    %122 = vmatpush2.msra.mxu0 0.0
    %123 = vmatprep.subr.mxu0 0.0
    %124 = vmatpush2.msra.mxu0 0.0
    %125 = vmatprep.subr.mxu0 0.0
    %126 = vmatpush2.msra.mxu0 0.0
    %127 = vmatprep.subr.mxu0 0.0
    %128 = vmatpush2.msra.mxu0 0.0
    %129 = vmatprep.subr.mxu0 0.0
    %130 = vmatpush2.msra.mxu0 0.0
    %131 = vmatprep.mubr.f32.mxu0 0.0
    %132 = vmatmul.mubr.f32.gmra.mxu0 %v52
    %v133 = vpop.f32.mrf.mxu0
    %v134 = vadd.f32 %v33, %v133
    %v135 = vpop.f32.mrf.mxu0
    %136 = vmatprep.mubr.f32.mxu0 0.0
    %137 = vmatmul.mubr.f32.gmra.mxu0 %v55
    %v138 = vpop.f32.mrf.mxu0
    %v139 = vadd.f32 %v38, %v138
    %v140 = vpop.f32.mrf.mxu0
    %141 = vmatprep.mubr.f32.mxu0 0.0
    %142 = vmatmul.mubr.f32.gmra.mxu0 %v58
    %v143 = vpop.f32.mrf.mxu0
    %v144 = vadd.f32 %v43, %v143
    %v145 = vpop.f32.mrf.mxu0
    %146 = vmatprep.mubr.f32.mxu0 0.0
    %147 = vmatmul.mubr.f32.gmra.mxu0 %v61
    %v148 = vpop.f32.mrf.mxu0
    %v149 = vadd.f32 %v48, %v148
    %v150 = vpop.f32.mrf.mxu0
    %151 = vdwg.mxu0
    %v152 = vld [vmem:[%s0] sm:$0x1]
    %153 = vset.pattern.permute.xlu0 1
    %154 = vperm.xlu0 %153, %v21
    %v155 = vpop.permute.xlu0 %154
    %157 = vset.pattern.permute.xlu0 1
    %158 = vperm.xlu0 %157, %v22
    %v159 = vpop.permute.xlu0 %158
    %161 = vset.pattern.permute.xlu0 1
    %162 = vperm.xlu0 %161, %v23
    %v163 = vpop.permute.xlu0 %162
    %165 = vset.pattern.permute.xlu0 1
    %166 = vperm.xlu0 %165, %v24
    %v167 = vpop.permute.xlu0 %166
    %v170 = vlaneseq
    %v171 = vshrl.u32 %v170, 7
    %v172 = vsub.s32 0, %v171
    %v173 = vrot.slane %v152, %v172
    %v175 = vmul.f32 %v155, %v173
    %v176 = vmul.f32 %v159, %v173
    %v177 = vmul.f32 %v163, %v173
    %v178 = vmul.f32 %v167, %v173
    %v179 = vsub.f32 %v134, %v175
    %v180 = vsub.f32 %v139, %v176
    %v181 = vsub.f32 %v144, %v177
    %v182 = vsub.f32 %v149, %v178
    %v183 = vmax.f32 %v179, 0.0
    %v184 = vmax.f32 %v180, 0.0
    %v185 = vmax.f32 %v181, 0.0
    %v186 = vmax.f32 %v182, 0.0
    %v187 = vld [vmem:[%s4] sm:$0x1]
    %189 = vset.pattern.permute.xlu0 32
    %190 = vperm.xlu0 %189, %v187
    %v191 = vpop.permute.xlu0 %190
    %v193 = vlaneseq
    %v194 = vshrl.u32 %v193, 7
    %v195 = vsub.s32 0, %v194
    %v196 = vrot.slane %v191, %v195
    %vm197 = vcmask 261120
    %v198 = vsel %vm197, %v187, 0
    %200 = vmatprep.subr.mxu0 0.0
    %201 = vmatpush1.msra.mxu0 0.0
    %202 = vmatprep.subr.mxu0 0.0
    %203 = vmatpush1.msra.mxu0 0.0
    %204 = vmatprep.subr.mxu0 0.0
    %205 = vmatpush1.msra.mxu0 0.0
    %206 = vmatprep.subr.mxu0 0.0
    %207 = vmatpush1.msra.mxu0 0.0
    %208 = vmatprep.subr.mxu0 0.0
    %209 = vmatpush1.msra.mxu0 0.0
    %210 = vmatprep.subr.mxu0 0.0
    %211 = vmatpush1.msra.mxu0 0.0
    %212 = vmatprep.subr.mxu0 0.0
    %213 = vmatpush1.msra.mxu0 0.0
    %214 = vmatprep.subr.mxu0 0.0
    %215 = vmatpush1.msra.mxu0 0.0
    %216 = vmatprep.subr.mxu0 0.0
    %217 = vmatpush1.msra.mxu0 0.0
    %218 = vmatprep.subr.mxu0 0.0
    %219 = vmatpush1.msra.mxu0 0.0
    %220 = vmatprep.subr.mxu0 0.0
    %221 = vmatpush1.msra.mxu0 0.0
    %222 = vmatprep.subr.mxu0 0.0
    %223 = vmatpush1.msra.mxu0 0.0
    %224 = vmatprep.subr.mxu0 0.0
    %225 = vmatpush1.msra.mxu0 %v186
    %226 = vmatprep.subr.mxu0 0.0
    %227 = vmatpush1.msra.mxu0 %v185
    %228 = vmatprep.subr.mxu0 0.0
    %229 = vmatpush1.msra.mxu0 %v184
    %230 = vmatprep.subr.mxu0 0.0
    %231 = vmatpush1.msra.mxu0 %v183
    %232 = vmatprep.subr.mxu0 0.0
    %233 = vmatpush2.msra.mxu0 0.0
    %234 = vmatprep.subr.mxu0 0.0
    %235 = vmatpush2.msra.mxu0 0.0
    %236 = vmatprep.subr.mxu0 0.0
    %237 = vmatpush2.msra.mxu0 0.0
    %238 = vmatprep.subr.mxu0 0.0
    %239 = vmatpush2.msra.mxu0 0.0
    %240 = vmatprep.subr.mxu0 0.0
    %241 = vmatpush2.msra.mxu0 0.0
    %242 = vmatprep.subr.mxu0 0.0
    %243 = vmatpush2.msra.mxu0 0.0
    %244 = vmatprep.subr.mxu0 0.0
    %245 = vmatpush2.msra.mxu0 0.0
    %246 = vmatprep.subr.mxu0 0.0
    %247 = vmatpush2.msra.mxu0 0.0
    %248 = vmatprep.subr.mxu0 0.0
    %249 = vmatpush2.msra.mxu0 0.0
    %250 = vmatprep.subr.mxu0 0.0
    %251 = vmatpush2.msra.mxu0 0.0
    %252 = vmatprep.subr.mxu0 0.0
    %253 = vmatpush2.msra.mxu0 0.0
    %254 = vmatprep.subr.mxu0 0.0
    %255 = vmatpush2.msra.mxu0 0.0
    %256 = vmatprep.subr.mxu0 0.0
    %257 = vmatpush2.msra.mxu0 0.0
    %258 = vmatprep.subr.mxu0 0.0
    %259 = vmatpush2.msra.mxu0 0.0
    %260 = vmatprep.subr.mxu0 0.0
    %261 = vmatpush2.msra.mxu0 0.0
    %262 = vmatprep.subr.mxu0 0.0
    %263 = vmatpush2.msra.mxu0 0.0
    %264 = vmatprep.mubr.f32.mxu0 0.0
    %265 = vmatmul.mubr.f32.gmra.mxu0 %v198
    %v266 = vpop.f32.mrf.mxu0
    %v267 = vadd.f32 %v196, %v266
    %v268 = vpop.f32.mrf.mxu0
    %269 = vdwg.mxu0
    %270 = vst [vmem:[#allocation2] sm:$0x1] %v267
    // Predicated region
    $region22: #{tpu_custom_call.1} parent=1 // pred_check
      _
    $region23: #{tpu_custom_call.1} parent=1 // pred_check_branch
      %272 = sbr.rel (0) target = $region25
    $region24: #{tpu_custom_call.1} parent=1 // pred_region
      %s274 = ssub.s32 16, 16
      %275 = vsyncadd [#allocation3], %s274
      %s277 = sshll.u32 [#allocation2], 4
      %s278 = int_to_ptr.vmem [resolvable:$true] %s277
      %280 = dma.vmem_to_hbm [thread:$0]  %s278, 16, %s5, [#allocation3]
    $region25: #{tpu_custom_call.1} parent=1 // pred_fallthru
      _
    // Predicated region
    $region26: #{tpu_custom_call.1} parent=1 // pred_check
      _
    $region27: #{tpu_custom_call.1} parent=1 // pred_check_branch
      %282 = sbr.rel (0) target = $region29
    $region28: #{tpu_custom_call.1} parent=1 // pred_region
      %283 = dma.done [#allocation3], 16
    $region29: #{tpu_custom_call.1} parent=1 // pred_fallthru
      _
    %284 = vsyncpa [#allocation3], 1

</llo_original>
